<compile_context>
chip_gen: v6e
topology: v6e:2x2x1
jax: 0.10.0
libtpu: 0.0.40
codegen_flags: <defaults>
</compile_context>

<pallas_src>
import functools
import math

import jax
import jax.numpy as jnp
from jax.experimental import pallas as pl
from jax.experimental.pallas import tpu as pltpu

LANE = 128
VMEM_LIMIT = 32 * 1024 * 1024   # safe scoped-VMEM cap on v5e / v6e / v7x


def _round_up(x, m):
    return ((x + m - 1) // m) * m


def _pad_last(a, target):
    padn = target - a.shape[-1]
    if padn == 0:
        return a
    pads = [(0, 0)] * (a.ndim - 1) + [(0, padn)]
    return jnp.pad(a, pads)


# --------------------------------------------------------------------------- #
# Kernel 1: fused Conv1d('same') + ReLU + folded BatchNorm1d (eval)            #
#           im2col fused as a static tap loop of bf16 MXU matmuls              #
# --------------------------------------------------------------------------- #
def _conv_bn_relu_kernel(x_ref, w_ref, b_ref, s_ref, t_ref, o_ref, *, ksz, dil, T):
    # x_ref: (1, T + 2*pad, Cin) bf16 ; w_ref: (ksz, Cin, CoutP) bf16
    x = x_ref[0]                                    # (Tpad, Cin)
    acc = None
    for k in range(ksz):                            # fused im2col: shifted taps
        xs = x[k * dil:k * dil + T, :]              # (T, Cin)
        part = jnp.dot(xs, w_ref[k], preferred_element_type=jnp.float32)
        acc = part if acc is None else acc + part
    acc = acc + b_ref[...]                          # conv bias
    acc = jnp.maximum(acc, 0.0)                     # ReLU
    acc = acc * s_ref[...] + t_ref[...]             # folded BatchNorm (eval)
    o_ref[0] = acc.astype(o_ref.dtype)              # lane-dense bf16 store


def conv_bn_relu(x, p):
    """x: (B, T, Cin) -> (B, T, c_out) bf16. Conv1d('same') + ReLU + BN fused."""
    B, T, Cin = x.shape
    ksz, dil = p["ksz"], p["dil"]
    pad = dil * (ksz - 1) // 2
    xp = jnp.pad(x.astype(jnp.bfloat16), ((0, 0), (pad, pad), (0, 0)))
    Tp = T + 2 * pad
    CoutP = p["w"].shape[-1]
    out = pl.pallas_call(
        functools.partial(_conv_bn_relu_kernel, ksz=ksz, dil=dil, T=T),
        out_shape=jax.ShapeDtypeStruct((B, T, CoutP), jnp.bfloat16),
        grid=(B,),
        in_specs=[
            pl.BlockSpec((1, Tp, Cin), lambda b: (b, 0, 0)),
            pl.BlockSpec((ksz, Cin, CoutP), lambda b: (0, 0, 0)),
            pl.BlockSpec((1, CoutP), lambda b: (0, 0)),
            pl.BlockSpec((1, CoutP), lambda b: (0, 0)),
            pl.BlockSpec((1, CoutP), lambda b: (0, 0)),
        ],
        out_specs=pl.BlockSpec((1, T, CoutP), lambda b: (b, 0, 0)),
        compiler_params=pltpu.CompilerParams(
            dimension_semantics=("parallel",), vmem_limit_bytes=VMEM_LIMIT),
    )(xp, p["w"], p["b"], p["bn_s"], p["bn_t"])
    if CoutP != p["c_out"]:
        out = out[..., :p["c_out"]]
    return out


# --------------------------------------------------------------------------- #
# Kernel 2: fused attention scores + masked softmax + attentive-statistics     #
#           pooling + (asp_bn folded) final FC, one grid step per batch elem   #
# --------------------------------------------------------------------------- #
def _asp_head_kernel(h_ref, m_ref, w1_ref, b1_ref, w2_ref, b2_ref,
                     fcw_ref, fcb_ref, o_ref, *, C):
    h = h_ref[0]                                    # (T, C) bf16
    hf = h.astype(jnp.float32)
    valid = m_ref[0] > 0.5                          # (T, 1)

    # attention scores (tanh(linear) -> linear), bf16 MXU / f32 epilogue
    s1 = jnp.tanh(jnp.dot(h, w1_ref[...], preferred_element_type=jnp.float32)
                  + b1_ref[...])                    # (T, A)
    s2 = (jnp.dot(s1.astype(jnp.bfloat16), w2_ref[...],
                  preferred_element_type=jnp.float32) + b2_ref[...])   # (T, C)

    # masked softmax over time
    s2 = jnp.where(valid, s2, -1e30)
    s_max = jnp.max(s2, axis=0, keepdims=True)
    e = jnp.where(valid, jnp.exp(s2 - s_max), 0.0)
    w = e / jnp.sum(e, axis=0, keepdims=True)       # (T, C)

    # attentive statistics
    mean = jnp.sum(w * hf, axis=0, keepdims=True)                      # (1, C)
    var = jnp.sum(w * hf * hf, axis=0, keepdims=True) - mean * mean
    std = jnp.sqrt(jnp.maximum(var, 1e-12))

    # final FC with asp_bn folded in (fcw is [mean-part ; std-part])
    fcw = fcw_ref[...]                              # (2C, EP) f32
    emb = (jnp.dot(mean, fcw[:C], preferred_element_type=jnp.float32)
           + jnp.dot(std, fcw[C:], preferred_element_type=jnp.float32)
           + fcb_ref[...])
    o_ref[0] = emb.astype(o_ref.dtype)


def asp_head(h, mask, p):
    """h: (B, T, C) bf16, mask: (B, T, 1) -> prosody embedding (B, embed_dim)."""
    B, T, C = h.shape
    A = p["att_w1"].shape[-1]
    EP = p["fc_w"].shape[-1]
    out = pl.pallas_call(
        functools.partial(_asp_head_kernel, C=C),
        out_shape=jax.ShapeDtypeStruct((B, 1, EP), jnp.float32),
        grid=(B,),
        in_specs=[
            pl.BlockSpec((1, T, C), lambda b: (b, 0, 0)),
            pl.BlockSpec((1, T, 1), lambda b: (b, 0, 0)),
            pl.BlockSpec((C, A), lambda b: (0, 0)),
            pl.BlockSpec((1, A), lambda b: (0, 0)),
            pl.BlockSpec((A, C), lambda b: (0, 0)),
            pl.BlockSpec((1, C), lambda b: (0, 0)),
            pl.BlockSpec((2 * C, EP), lambda b: (0, 0)),
            pl.BlockSpec((1, EP), lambda b: (0, 0)),
        ],
        out_specs=pl.BlockSpec((1, 1, EP), lambda b: (b, 0, 0)),
        compiler_params=pltpu.CompilerParams(
            dimension_semantics=("parallel",), vmem_limit_bytes=VMEM_LIMIT),
    )(h, mask.astype(jnp.float32), p["att_w1"], p["att_b1"],
      p["att_w2"], p["att_b2"], p["fc_w"], p["fc_b"])
    return out[:, 0, :p["embed_dim"]]


# --------------------------------------------------------------------------- #
# Kernel 3: positional blend  seqs + alpha * PE  on a flattened (B*S, D) view  #
# --------------------------------------------------------------------------- #
def _pos_blend_kernel(e_ref, p_ref, a_ref, o_ref):
    o_ref[...] = e_ref[...] + a_ref[0, 0] * p_ref[...]


def pos_blend(emb, pe, alpha):
    B, S, D = emb.shape
    rows = B * S
    x2 = emb.reshape(rows, D).astype(jnp.float32)
    p2 = jnp.broadcast_to(pe[None], (B, S, D)).reshape(rows, D).astype(jnp.float32)
    tm = 512 if rows > 512 else _round_up(rows, 8)
    rows_p = _round_up(rows, tm)
    if rows_p != rows:
        x2 = jnp.pad(x2, ((0, rows_p - rows), (0, 0)))
        p2 = jnp.pad(p2, ((0, rows_p - rows), (0, 0)))
    a2 = alpha.reshape(1, 1).astype(jnp.float32)
    out = pl.pallas_call(
        _pos_blend_kernel,
        out_shape=jax.ShapeDtypeStruct((rows_p, D), jnp.float32),
        grid=(rows_p // tm,),
        in_specs=[
            pl.BlockSpec((tm, D), lambda i: (i, 0)),
            pl.BlockSpec((tm, D), lambda i: (i, 0)),
            pl.BlockSpec((1, 1), lambda i: (0, 0)),
        ],
        out_specs=pl.BlockSpec((tm, D), lambda i: (i, 0)),
        compiler_params=pltpu.CompilerParams(
            dimension_semantics=("parallel",), vmem_limit_bytes=VMEM_LIMIT),
    )(x2, p2, a2)
    return out[:rows].reshape(B, S, D)


# --------------------------------------------------------------------------- #
# Parameter construction (all layout / dtype conversion hoisted out of forward)#
# --------------------------------------------------------------------------- #
def fold_bn(gamma, beta, running_mean, running_var, eps=1e-5):
    scale = gamma / jnp.sqrt(running_var + eps)
    shift = beta - running_mean * scale
    return scale, shift


def init_tdnn_block(key, c_in, c_out, ksz, dil):
    k1, k2, k3, k4 = jax.random.split(key, 4)
    W = jax.random.normal(k1, (c_out, c_in, ksz), jnp.float32) / math.sqrt(c_in * ksz)
    b = 0.01 * jax.random.normal(k2, (c_out,), jnp.float32)
    gamma = 1.0 + 0.1 * jax.random.normal(k3, (c_out,), jnp.float32)
    beta = 0.1 * jax.random.normal(k4, (c_out,), jnp.float32)
    scale, shift = fold_bn(gamma, beta, jnp.zeros((c_out,)), jnp.ones((c_out,)))
    c_out_p = _round_up(c_out, LANE)
    # PyTorch Conv1d weight (Cout, Cin, K) -> (K, Cin, CoutP) bf16, lane-padded.
    w = _pad_last(jnp.transpose(W, (2, 1, 0)), c_out_p).astype(jnp.bfloat16)
    return dict(
        ksz=ksz, dil=dil, c_out=c_out, w=w,
        b=_pad_last(b, c_out_p).reshape(1, c_out_p).astype(jnp.float32),
        bn_s=_pad_last(scale, c_out_p).reshape(1, c_out_p).astype(jnp.float32),
        bn_t=_pad_last(shift, c_out_p).reshape(1, c_out_p).astype(jnp.float32),
    )


def init_prosody_encoder(key, input_dim, channels, mfa_channels, att_channels, embed_dim):
    keys = jax.random.split(key, 12)
    blocks = [
        init_tdnn_block(keys[0], input_dim, channels, 5, 1),
        # TODO(synk): ECAPA_TDNN uses SERes2NetBlocks (Res2Net + squeeze-excite) here;
        # simplified to plain dilated TDNN blocks of matching tensor shapes.
        init_tdnn_block(keys[1], channels, channels, 3, 2),
        init_tdnn_block(keys[2], channels, channels, 3, 3),
    ]
    mfa = init_tdnn_block(keys[3], 2 * channels, mfa_channels, 1, 1)

    att_w1 = jax.random.normal(keys[4], (mfa_channels, att_channels), jnp.float32) / math.sqrt(mfa_channels)
    att_b1 = 0.01 * jax.random.normal(keys[5], (att_channels,), jnp.float32)
    att_w2 = jax.random.normal(keys[6], (att_channels, mfa_channels), jnp.float32) / math.sqrt(att_channels)
    att_b2 = 0.01 * jax.random.normal(keys[7], (mfa_channels,), jnp.float32)

    # asp_bn (BatchNorm1d over 2*Cmfa, eval mode) folded into the final 1x1 conv (fc).
    gamma = 1.0 + 0.1 * jax.random.normal(keys[8], (2 * mfa_channels,), jnp.float32)
    beta = 0.1 * jax.random.normal(keys[9], (2 * mfa_channels,), jnp.float32)
    bn_s, bn_t = fold_bn(gamma, beta, jnp.zeros((2 * mfa_channels,)), jnp.ones((2 * mfa_channels,)))
    Wfc = jax.random.normal(keys[10], (2 * mfa_channels, embed_dim), jnp.float32) / math.sqrt(2 * mfa_channels)
    bfc = 0.01 * jax.random.normal(keys[11], (embed_dim,), jnp.float32)
    fc_w = bn_s[:, None] * Wfc
    fc_b = bn_t @ Wfc + bfc

    e_pad = _round_up(embed_dim, LANE)
    return dict(
        blocks=blocks, mfa=mfa,
        att_w1=att_w1.astype(jnp.bfloat16),
        att_b1=att_b1.reshape(1, -1).astype(jnp.float32),
        att_w2=att_w2.astype(jnp.bfloat16),
        att_b2=att_b2.reshape(1, -1).astype(jnp.float32),
        fc_w=_pad_last(fc_w, e_pad).astype(jnp.float32),
        fc_b=_pad_last(fc_b, e_pad).reshape(1, e_pad).astype(jnp.float32),
        embed_dim=embed_dim,
    )


def prosody_encoder_forward(p, x, mask):
    """Simplified ECAPA_TDNN: x (B,T,F), mask (B,T,1) -> (B, embed_dim)."""
    h0 = conv_bn_relu(x, p["blocks"][0])
    h1 = conv_bn_relu(h0, p["blocks"][1])
    h2 = conv_bn_relu(h1, p["blocks"][2])
    h = jnp.concatenate([h1, h2], axis=-1)          # multi-layer feature aggregation
    h = conv_bn_relu(h, p["mfa"])                   # (B, T, Cmfa) bf16
    # TODO(synk): ECAPA attention uses a TDNNBlock with global-context concat
    # before Tanh->Conv; simplified here to tanh(linear)->linear on h alone.
    return asp_head(h, mask, p)


def sinusoidal_position_encoding(S, D):
    # TODO(synk): fairseq2's SinusoidalPositionEncoder uses a half-split sin/cos
    # layout; standard transformer interleaved sin/cos is used here.
    pos = jnp.arange(S, dtype=jnp.float32)[:, None]
    idx = jnp.arange(D // 2, dtype=jnp.float32)[None, :]
    angles = pos / jnp.power(10000.0, 2.0 * idx / D)
    pe = jnp.zeros((S, D), jnp.float32)
    pe = pe.at[:, 0::2].set(jnp.sin(angles))
    pe = pe.at[:, 1::2].set(jnp.cos(angles))
    return pe


def init_frontend(key, vocab_size, model_dim, lang_to_index, lang_embed_dim,
                  prosody_input_dim, channels, mfa_channels, att_channels,
                  prosody_embed_dim, max_seq_len=512):
    k1, k2, k3 = jax.random.split(key, 3)
    return dict(
        prosody_encoder=init_prosody_encoder(k1, prosody_input_dim, channels,
                                             mfa_channels, att_channels, prosody_embed_dim),
        embed_tokens=0.02 * jax.random.normal(k2, (vocab_size, model_dim), jnp.float32),
        embed_lang=0.02 * jax.random.normal(k3, (len(lang_to_index), lang_embed_dim), jnp.float32),
        pos_emb_alpha=jnp.ones((1,), jnp.float32),
        pos_table=sinusoidal_position_encoding(max_seq_len, model_dim),  # hoisted
        lang_to_index=lang_to_index,
    )


def pretssel_encoder_frontend_forward(params, seqs, padding_mask,
                                      prosody_input_seqs, prosody_padding_mask, tgt_lang):
    # prosody_embs = prosody_encoder(prosody_input_seqs, prosody_padding_mask).unsqueeze(1)
    pros = prosody_encoder_forward(params["prosody_encoder"],
                                   prosody_input_seqs, prosody_padding_mask)
    pros = pros[:, None, :]                                      # (B, 1, E)

    # language embedding repeated over batch, concatenated on the last dim (JAX glue)
    lang_idx = params["lang_to_index"][tgt_lang]
    lang_vec = params["embed_lang"][lang_idx]
    B, S = seqs.shape
    lang_embs = jnp.broadcast_to(lang_vec[None, None, :], (B, 1, lang_vec.shape[0]))
    prosody_embs = jnp.concatenate([pros, lang_embs], axis=-1)   # (B, 1, E + L)

    # token embedding gather (JAX glue), then fused positional blend in Pallas
    emb = params["embed_tokens"][seqs]                           # (B, S, D)
    pe = params["pos_table"][:S]
    out = pos_blend(emb, pe, params["pos_emb_alpha"])
    # TODO(synk): Dropout is identity in eval mode; training-time RNG dropout not applied.
    return out, prosody_embs


if __name__ == "__main__":
    key = jax.random.PRNGKey(0)
    k_params, k_tok, k_pros = jax.random.split(key, 3)

    B, S = 2, 8                      # unit-token sequence
    model_dim, vocab_size = 128, 64
    T, prosody_input_dim = 16, 16    # prosody (mel) input
    channels, mfa_channels, att_channels = 64, 128, 64
    prosody_embed_dim, lang_embed_dim = 64, 8
    lang_to_index = {"eng": 0, "fra": 1, "deu": 2}

    params = init_frontend(k_params, vocab_size, model_dim, lang_to_index, lang_embed_dim,
                           prosody_input_dim, channels, mfa_channels, att_channels,
                           prosody_embed_dim, max_seq_len=64)

    seqs = jax.random.randint(k_tok, (B, S), 0, vocab_size)                     # token ids
    prosody_input_seqs = jax.random.normal(k_pros, (B, T, prosody_input_dim), jnp.float32)
    prosody_lens = jnp.array([T, T - 4], jnp.int32)
    prosody_padding_mask = (jnp.arange(T)[None, :] < prosody_lens[:, None]
                            ).astype(jnp.float32)[:, :, None]                   # (B, T, 1)

    seqs_out, prosody_embs = pretssel_encoder_frontend_forward(
        params, seqs, None, prosody_input_seqs, prosody_padding_mask, "fra")
    jax.block_until_ready((seqs_out, prosody_embs))

    assert seqs_out.shape == (B, S, model_dim)
    assert prosody_embs.shape == (B, 1, prosody_embed_dim + lang_embed_dim)
    assert bool(jnp.all(jnp.isfinite(seqs_out)))
    assert bool(jnp.all(jnp.isfinite(prosody_embs)))
    print("KERNEL_OK")
</pallas_src>

<mosaic_0001>
module attributes {stable_mosaic.version = 11 : i64} {
  func.func @_conv_bn_relu_kernel(%arg0: i32, %arg1: memref<1x20x16xbf16, #tpu.memory_space<vmem>>, %arg2: memref<5x16x128xbf16, #tpu.memory_space<vmem>>, %arg3: memref<1x128xf32, #tpu.memory_space<vmem>>, %arg4: memref<1x128xf32, #tpu.memory_space<vmem>>, %arg5: memref<1x128xf32, #tpu.memory_space<vmem>>, %arg6: memref<1x16x128xbf16, #tpu.memory_space<vmem>>) attributes {dimension_semantics = [#tpu.dimension_semantics<parallel>], iteration_bounds = array<i64: 2>, scalar_prefetch = 0 : i64, scratch_operands = 0 : i64, tpu.core_type = #tpu.core_type<tc>, window_params = [{transform_indices = @transform_0, window_bounds = array<i64: 1, 20, 16>}, {pipeline_mode = #tpu.pipeline_mode<synchronous>, transform_indices = @transform_1, window_bounds = array<i64: 5, 16, 128>}, {pipeline_mode = #tpu.pipeline_mode<synchronous>, transform_indices = @transform_2, window_bounds = array<i64: 1, 128>}, {pipeline_mode = #tpu.pipeline_mode<synchronous>, transform_indices = @transform_3, window_bounds = array<i64: 1, 128>}, {pipeline_mode = #tpu.pipeline_mode<synchronous>, transform_indices = @transform_4, window_bounds = array<i64: 1, 128>}, {transform_indices = @transform_5, window_bounds = array<i64: 1, 16, 128>}]} {
    %c0 = arith.constant 0 : index
    %c0_0 = arith.constant 0 : index
    %c0_1 = arith.constant 0 : index
    %0 = vector.load %arg1[%c0, %c0_0, %c0_1] : memref<1x20x16xbf16, #tpu.memory_space<vmem>>, vector<1x20x16xbf16>
    %1 = vector.shape_cast %0 : vector<1x20x16xbf16> to vector<20x16xbf16>
    %2 = vector.extract_strided_slice %1 {offsets = [0, 0], sizes = [16, 16], strides = [1, 1]} : vector<20x16xbf16> to vector<16x16xbf16>
    %c0_2 = arith.constant 0 : index
    %c0_3 = arith.constant 0 : index
    %c0_4 = arith.constant 0 : index
    %3 = vector.load %arg2[%c0_2, %c0_3, %c0_4] : memref<5x16x128xbf16, #tpu.memory_space<vmem>>, vector<1x16x128xbf16>
    %4 = vector.shape_cast %3 : vector<1x16x128xbf16> to vector<16x128xbf16>
    %cst = arith.constant dense<0.000000e+00> : vector<16x128xf32>
    %5 = tpu.matmul %2, %4, %cst {dimension_numbers = #tpu.dot_dimension_numbers<[1], [0], [0], [1], [0, 0, 1, 1], [], []>} : vector<16x16xbf16>, vector<16x128xbf16>, vector<16x128xf32> -> vector<16x128xf32>
    %6 = vector.extract_strided_slice %1 {offsets = [1, 0], sizes = [16, 16], strides = [1, 1]} : vector<20x16xbf16> to vector<16x16xbf16>
    %c1 = arith.constant 1 : index
    %c0_5 = arith.constant 0 : index
    %c0_6 = arith.constant 0 : index
    %7 = vector.load %arg2[%c1, %c0_5, %c0_6] : memref<5x16x128xbf16, #tpu.memory_space<vmem>>, vector<1x16x128xbf16>
    %8 = vector.shape_cast %7 : vector<1x16x128xbf16> to vector<16x128xbf16>
    %cst_7 = arith.constant dense<0.000000e+00> : vector<16x128xf32>
    %9 = tpu.matmul %6, %8, %cst_7 {dimension_numbers = #tpu.dot_dimension_numbers<[1], [0], [0], [1], [0, 0, 1, 1], [], []>} : vector<16x16xbf16>, vector<16x128xbf16>, vector<16x128xf32> -> vector<16x128xf32>
    %10 = arith.addf %5, %9 : vector<16x128xf32>
    %11 = vector.extract_strided_slice %1 {offsets = [2, 0], sizes = [16, 16], strides = [1, 1]} : vector<20x16xbf16> to vector<16x16xbf16>
    %c2 = arith.constant 2 : index
    %c0_8 = arith.constant 0 : index
    %c0_9 = arith.constant 0 : index
    %12 = vector.load %arg2[%c2, %c0_8, %c0_9] : memref<5x16x128xbf16, #tpu.memory_space<vmem>>, vector<1x16x128xbf16>
    %13 = vector.shape_cast %12 : vector<1x16x128xbf16> to vector<16x128xbf16>
    %cst_10 = arith.constant dense<0.000000e+00> : vector<16x128xf32>
    %14 = tpu.matmul %11, %13, %cst_10 {dimension_numbers = #tpu.dot_dimension_numbers<[1], [0], [0], [1], [0, 0, 1, 1], [], []>} : vector<16x16xbf16>, vector<16x128xbf16>, vector<16x128xf32> -> vector<16x128xf32>
    %15 = arith.addf %10, %14 : vector<16x128xf32>
    %16 = vector.extract_strided_slice %1 {offsets = [3, 0], sizes = [16, 16], strides = [1, 1]} : vector<20x16xbf16> to vector<16x16xbf16>
    %c3 = arith.constant 3 : index
    %c0_11 = arith.constant 0 : index
    %c0_12 = arith.constant 0 : index
    %17 = vector.load %arg2[%c3, %c0_11, %c0_12] : memref<5x16x128xbf16, #tpu.memory_space<vmem>>, vector<1x16x128xbf16>
    %18 = vector.shape_cast %17 : vector<1x16x128xbf16> to vector<16x128xbf16>
    %cst_13 = arith.constant dense<0.000000e+00> : vector<16x128xf32>
    %19 = tpu.matmul %16, %18, %cst_13 {dimension_numbers = #tpu.dot_dimension_numbers<[1], [0], [0], [1], [0, 0, 1, 1], [], []>} : vector<16x16xbf16>, vector<16x128xbf16>, vector<16x128xf32> -> vector<16x128xf32>
    %20 = arith.addf %15, %19 : vector<16x128xf32>
    %21 = vector.extract_strided_slice %1 {offsets = [4, 0], sizes = [16, 16], strides = [1, 1]} : vector<20x16xbf16> to vector<16x16xbf16>
    %c4 = arith.constant 4 : index
    %c0_14 = arith.constant 0 : index
    %c0_15 = arith.constant 0 : index
    %22 = vector.load %arg2[%c4, %c0_14, %c0_15] : memref<5x16x128xbf16, #tpu.memory_space<vmem>>, vector<1x16x128xbf16>
    %23 = vector.shape_cast %22 : vector<1x16x128xbf16> to vector<16x128xbf16>
    %cst_16 = arith.constant dense<0.000000e+00> : vector<16x128xf32>
    %24 = tpu.matmul %21, %23, %cst_16 {dimension_numbers = #tpu.dot_dimension_numbers<[1], [0], [0], [1], [0, 0, 1, 1], [], []>} : vector<16x16xbf16>, vector<16x128xbf16>, vector<16x128xf32> -> vector<16x128xf32>
    %25 = arith.addf %20, %24 : vector<16x128xf32>
    %c0_17 = arith.constant 0 : index
    %c0_18 = arith.constant 0 : index
    %26 = vector.load %arg3[%c0_17, %c0_18] : memref<1x128xf32, #tpu.memory_space<vmem>>, vector<1x128xf32>
    %27 = vector.broadcast %26 : vector<1x128xf32> to vector<16x128xf32>
    %28 = arith.addf %25, %27 : vector<16x128xf32>
    %cst_19 = arith.constant 0.000000e+00 : f32
    %29 = vector.broadcast %cst_19 : f32 to vector<16x128xf32>
    %30 = arith.maximumf %28, %29 : vector<16x128xf32>
    %c0_20 = arith.constant 0 : index
    %c0_21 = arith.constant 0 : index
    %31 = vector.load %arg4[%c0_20, %c0_21] : memref<1x128xf32, #tpu.memory_space<vmem>>, vector<1x128xf32>
    %32 = vector.broadcast %31 : vector<1x128xf32> to vector<16x128xf32>
    %33 = arith.mulf %30, %32 : vector<16x128xf32>
    %c0_22 = arith.constant 0 : index
    %c0_23 = arith.constant 0 : index
    %34 = vector.load %arg5[%c0_22, %c0_23] : memref<1x128xf32, #tpu.memory_space<vmem>>, vector<1x128xf32>
    %35 = vector.broadcast %34 : vector<1x128xf32> to vector<16x128xf32>
    %36 = arith.addf %33, %35 : vector<16x128xf32>
    %37 = arith.truncf %36 : vector<16x128xf32> to vector<16x128xbf16>
    %c0_24 = arith.constant 0 : index
    %c0_25 = arith.constant 0 : index
    %c0_26 = arith.constant 0 : index
    %38 = vector.load %arg6[%c0_24, %c0_25, %c0_26] : memref<1x16x128xbf16, #tpu.memory_space<vmem>>, vector<1x16x128xbf16>
    %39 = vector.shape_cast %38 : vector<1x16x128xbf16> to vector<16x128xbf16>
    %40 = vector.shape_cast %37 : vector<16x128xbf16> to vector<1x16x128xbf16>
    tpu.vector_store %arg6[%c0_24, %c0_25, %c0_26], %40 {strides = array<i32>} : memref<1x16x128xbf16, #tpu.memory_space<vmem>>, vector<1x16x128xbf16>,
    return
  }
  func.func @transform_0(%arg0: i32) -> (i32, i32, i32) {
    %c0_i32 = arith.constant 0 : i32
    %c0_i32_0 = arith.constant 0 : i32
    %c0_i32_1 = arith.constant 0 : i32
    return %arg0, %c0_i32, %c0_i32_0 : i32, i32, i32
  }
  func.func @transform_1(%arg0: i32) -> (i32, i32, i32) {
    %c0_i32 = arith.constant 0 : i32
    %c0_i32_0 = arith.constant 0 : i32
    %c0_i32_1 = arith.constant 0 : i32
    %c0_i32_2 = arith.constant 0 : i32
    return %c0_i32, %c0_i32_0, %c0_i32_1 : i32, i32, i32
  }
  func.func @transform_2(%arg0: i32) -> (i32, i32) {
    %c0_i32 = arith.constant 0 : i32
    %c0_i32_0 = arith.constant 0 : i32
    %c0_i32_1 = arith.constant 0 : i32
    return %c0_i32, %c0_i32_0 : i32, i32
  }
  func.func @transform_3(%arg0: i32) -> (i32, i32) {
    %c0_i32 = arith.constant 0 : i32
    %c0_i32_0 = arith.constant 0 : i32
    %c0_i32_1 = arith.constant 0 : i32
    return %c0_i32, %c0_i32_0 : i32, i32
  }
  func.func @transform_4(%arg0: i32) -> (i32, i32) {
    %c0_i32 = arith.constant 0 : i32
    %c0_i32_0 = arith.constant 0 : i32
    %c0_i32_1 = arith.constant 0 : i32
    return %c0_i32, %c0_i32_0 : i32, i32
  }
  func.func @transform_5(%arg0: i32) -> (i32, i32, i32) {
    %c0_i32 = arith.constant 0 : i32
    %c0_i32_0 = arith.constant 0 : i32
    %c0_i32_1 = arith.constant 0 : i32
    return %arg0, %c0_i32, %c0_i32_0 : i32, i32, i32
  }
}

</mosaic_0001>

<llo_original>
// kernel: tpu_custom_call.1
$region0: #{tpu_custom_call.1}
  #allocation0 [shape = 'u32[]', space=smem, size = 0x4, offset = 0x4, fixed_abs, tag = 'smem constant byte address 0x4 - core index']
  #allocation1 [shape = 'u32[144,128]{1,0:T(1,128)}', space=vmem, size = 0x12000, scoped, tag = 'internal scratch']
  %s0 = inlined_call_operand.vmem [shape: bf16[2,20,16], index: 0, kind: input, shape index: {}]
  %s1 = inlined_call_operand.vmem [shape: bf16[5,16,128], index: 1, kind: input, shape index: {}]
  %s2 = inlined_call_operand.vmem [shape: f32[1,128], index: 2, kind: input, shape index: {}]
  %s3 = inlined_call_operand.vmem [shape: f32[1,128], index: 3, kind: input, shape index: {}]
  %s4 = inlined_call_operand.vmem [shape: f32[1,128], index: 4, kind: input, shape index: {}]
  %s5 = inlined_call_operand.hbm [shape: bf16[2,16,128], index: 5, kind: output, shape index: {}]
  %s6 = sld [smem:[#allocation0]]
  $region53: #{tpu_custom_call.1} parent=0
    _
  %s8 = ssub.s32 1, %s6
  %s9 = scalar_select 0, %s8, %s6
  $region1: #{tpu_custom_call.1} parent=0
    #allocation2 [shape = 'u8[8192]{0}', space=vmem, size = 0x2000, scoped, tag = 'output window, operand 0']
    #allocation3 [shape = 's32[2]{0}', space=sflag, size = 0x8, scoped, tag = 'scoped memory for tpu_custom_call.1']
    %10 = vsyncpa [#allocation3], 0
    %s11 = scalar_lea.sflag [#allocation3], 1
    %12 = vsyncpa %s11, 0
    loop: start=0, step=1, limit=4
    $region2: #{tpu_custom_call.1} parent=1 // loop_pre_header
      _
    $region3: #{tpu_custom_call.1} parent=1 // loop_header
      %s14 = sphi 0, %s18
      %p15 = scmp.ge.s32.totalorder %s14, 4
      %s24 = sphi 0, %s26
      %s27 = sphi 0, %s24
      %s28 = sphi 0, %s27
      %s44 = sphi 0, %s28
      %s48 = sphi 0, %s48
      %s50 = sphi 0, %s48
      %s51 = sphi 0, %s50
      %s65 = sphi 0, %s51
      %s69 = sphi 0, %s69
      %s71 = sphi 0, %s69
      %s72 = sphi 0, %s71
      %s86 = sphi 0, %s72
      %s90 = sphi 0, %s90
      %s92 = sphi 0, %s90
      %s93 = sphi 0, %s92
      %s107 = sphi 0, %s93
      %s111 = sphi 0, %s111
      %s113 = sphi 0, %s111
      %s114 = sphi 0, %s113
      %s128 = sphi 0, %s114
      %s134 = sphi 0, %s136
      %s137 = sphi 0, %s134
      %s138 = sphi 0, %s137
      %s154 = sphi 0, %s138
    $region4: #{tpu_custom_call.1} parent=1 // loop_header_branch
      %17 = sbr.rel (%p15) target = $region8
    $region5: #{tpu_custom_call.1} parent=1 // loop_body
      %s19 = ssub.s32 %s14, 1
      %s20 = ssub.s32 %s14, 2
      %s21 = sadd.s32 %s14, 1
      %s22 = ssub.s32 %s14, %s21
      %p23 = scmp.eq.s32.totalorder %s22, 0
      %s25 = sadd.s32 %s24, 1
      %s26 = scalar_select %p23, %s24, %s25
      %p29 = pneg %p23
      %p30 = scmp.eq.s32.totalorder %s14, 1
      %p31 = por %p29, %p30
      %p32 = scmp.ne.s32.totalorder %s24, %s27
      %p33 = scmp.eq.s32.totalorder %s14, 0
      %p34 = por %p32, %p33
      %p35 = scmp.ne.s32.totalorder %s24, %s27
      %p36 = scmp.eq.s32.totalorder %s19, 1
      %p37 = por %p35, %p36
      %p38 = scmp.ne.s32.totalorder %s27, %s28
      %p39 = scmp.eq.s32.totalorder %s19, 0
      %p40 = por %p38, %p39
      %p41 = scmp.ne.s32.totalorder %s27, %s28
      %p42 = scmp.eq.s32.totalorder %s20, 1
      %p43 = por %p41, %p42
      %p45 = scmp.ne.s32.totalorder %s28, %s44
      %p46 = scmp.eq.s32.totalorder %s20, 0
      %p47 = por %p45, %p46
      %s49 = sadd.s32 %s48, 1
      %p52 = scmp.eq.s32.totalorder %s14, 1
      %p53 = scmp.ne.s32.totalorder %s48, %s50
      %p54 = scmp.eq.s32.totalorder %s14, 0
      %p55 = por %p53, %p54
      %p56 = scmp.ne.s32.totalorder %s48, %s50
      %p57 = scmp.eq.s32.totalorder %s19, 1
      %p58 = por %p56, %p57
      %p59 = scmp.ne.s32.totalorder %s50, %s51
      %p60 = scmp.eq.s32.totalorder %s19, 0
      %p61 = por %p59, %p60
      %p62 = scmp.ne.s32.totalorder %s50, %s51
      %p63 = scmp.eq.s32.totalorder %s20, 1
      %p64 = por %p62, %p63
      %p66 = scmp.ne.s32.totalorder %s51, %s65
      %p67 = scmp.eq.s32.totalorder %s20, 0
      %p68 = por %p66, %p67
      %s70 = sadd.s32 %s69, 1
      %p73 = scmp.eq.s32.totalorder %s14, 1
      %p74 = scmp.ne.s32.totalorder %s69, %s71
      %p75 = scmp.eq.s32.totalorder %s14, 0
      %p76 = por %p74, %p75
      %p77 = scmp.ne.s32.totalorder %s69, %s71
      %p78 = scmp.eq.s32.totalorder %s19, 1
      %p79 = por %p77, %p78
      %p80 = scmp.ne.s32.totalorder %s71, %s72
      %p81 = scmp.eq.s32.totalorder %s19, 0
      %p82 = por %p80, %p81
      %p83 = scmp.ne.s32.totalorder %s71, %s72
      %p84 = scmp.eq.s32.totalorder %s20, 1
      %p85 = por %p83, %p84
      %p87 = scmp.ne.s32.totalorder %s72, %s86
      %p88 = scmp.eq.s32.totalorder %s20, 0
      %p89 = por %p87, %p88
      %s91 = sadd.s32 %s90, 1
      %p94 = scmp.eq.s32.totalorder %s14, 1
      %p95 = scmp.ne.s32.totalorder %s90, %s92
      %p96 = scmp.eq.s32.totalorder %s14, 0
      %p97 = por %p95, %p96
      %p98 = scmp.ne.s32.totalorder %s90, %s92
      %p99 = scmp.eq.s32.totalorder %s19, 1
      %p100 = por %p98, %p99
      %p101 = scmp.ne.s32.totalorder %s92, %s93
      %p102 = scmp.eq.s32.totalorder %s19, 0
      %p103 = por %p101, %p102
      %p104 = scmp.ne.s32.totalorder %s92, %s93
      %p105 = scmp.eq.s32.totalorder %s20, 1
      %p106 = por %p104, %p105
      %p108 = scmp.ne.s32.totalorder %s93, %s107
      %p109 = scmp.eq.s32.totalorder %s20, 0
      %p110 = por %p108, %p109
      %s112 = sadd.s32 %s111, 1
      %p115 = scmp.eq.s32.totalorder %s14, 1
      %p116 = scmp.ne.s32.totalorder %s111, %s113
      %p117 = scmp.eq.s32.totalorder %s14, 0
      %p118 = por %p116, %p117
      %p119 = scmp.ne.s32.totalorder %s111, %s113
      %p120 = scmp.eq.s32.totalorder %s19, 1
      %p121 = por %p119, %p120
      %p122 = scmp.ne.s32.totalorder %s113, %s114
      %p123 = scmp.eq.s32.totalorder %s19, 0
      %p124 = por %p122, %p123
      %p125 = scmp.ne.s32.totalorder %s113, %s114
      %p126 = scmp.eq.s32.totalorder %s20, 1
      %p127 = por %p125, %p126
      %p129 = scmp.ne.s32.totalorder %s114, %s128
      %p130 = scmp.eq.s32.totalorder %s20, 0
      %p131 = por %p129, %p130
      %s132 = ssub.s32 %s14, %s21
      %p133 = scmp.eq.s32.totalorder %s132, 0
      %s135 = sadd.s32 %s134, 1
      %s136 = scalar_select %p133, %s134, %s135
      %p139 = pneg %p133
      %p140 = scmp.eq.s32.totalorder %s14, 1
      %p141 = por %p139, %p140
      %p142 = scmp.ne.s32.totalorder %s134, %s137
      %p143 = scmp.eq.s32.totalorder %s14, 0
      %p144 = por %p142, %p143
      %p145 = scmp.ne.s32.totalorder %s134, %s137
      %p146 = scmp.eq.s32.totalorder %s19, 1
      %p147 = por %p145, %p146
      %p148 = scmp.ne.s32.totalorder %s137, %s138
      %p149 = scmp.eq.s32.totalorder %s19, 0
      %p150 = por %p148, %p149
      %p151 = scmp.ne.s32.totalorder %s137, %s138
      %p152 = scmp.eq.s32.totalorder %s20, 1
      %p153 = por %p151, %p152
      %p155 = scmp.ne.s32.totalorder %s138, %s154
      %p156 = scmp.eq.s32.totalorder %s20, 0
      %p157 = por %p155, %p156
      %p158 = scmp.le.s32.totalorder 1, %s14
      %p159 = scmp.lt.s32.totalorder %s14, 3
      %p160 = pnand %p158, %p159
      %p161 = pneg %p160
      // Predicated region
      $region9: #{tpu_custom_call.1} parent=5 // pred_check
        _
      $region10: #{tpu_custom_call.1} parent=5 // pred_check_branch
        %163 = sbr.rel (%p160) target = $region12
      $region11: #{tpu_custom_call.1} parent=5 // pred_region
        %s164 = ssub.s32 %s14, 1
        // Predicated region
        $region13: #{tpu_custom_call.1} parent=11 // pred_check
          %p165 = pneg %p61
        $region14: #{tpu_custom_call.1} parent=11 // pred_check_branch
          %167 = sbr.rel (%p165) target = $region16
        $region15: #{tpu_custom_call.1} parent=11 // pred_region
          _
        $region16: #{tpu_custom_call.1} parent=11 // pred_fallthru
          _
        // Predicated region
        $region17: #{tpu_custom_call.1} parent=11 // pred_check
          %p168 = pneg %p82
        $region18: #{tpu_custom_call.1} parent=11 // pred_check_branch
          %170 = sbr.rel (%p168) target = $region20
        $region19: #{tpu_custom_call.1} parent=11 // pred_region
          _
        $region20: #{tpu_custom_call.1} parent=11 // pred_fallthru
          _
        // Predicated region
        $region21: #{tpu_custom_call.1} parent=11 // pred_check
          %p171 = pneg %p103
        $region22: #{tpu_custom_call.1} parent=11 // pred_check_branch
          %173 = sbr.rel (%p171) target = $region24
        $region23: #{tpu_custom_call.1} parent=11 // pred_region
          _
        $region24: #{tpu_custom_call.1} parent=11 // pred_fallthru
          _
        // Predicated region
        $region25: #{tpu_custom_call.1} parent=11 // pred_check
          %p174 = pneg %p124
        $region26: #{tpu_custom_call.1} parent=11 // pred_check_branch
          %176 = sbr.rel (%p174) target = $region28
        $region27: #{tpu_custom_call.1} parent=11 // pred_region
          _
        $region28: #{tpu_custom_call.1} parent=11 // pred_fallthru
          _
      $region12: #{tpu_custom_call.1} parent=5 // pred_fallthru
        _
      %p177 = scmp.lt.s32.totalorder %s14, 2
      // Predicated region
      $region29: #{tpu_custom_call.1} parent=5 // pred_check
        %p178 = pneg %p177
      $region30: #{tpu_custom_call.1} parent=5 // pred_check_branch
        %180 = sbr.rel (%p178) target = $region32
      $region31: #{tpu_custom_call.1} parent=5 // pred_region
        // Predicated region
        $region33: #{tpu_custom_call.1} parent=31 // pred_check
          %p181 = pneg %p34
        $region34: #{tpu_custom_call.1} parent=31 // pred_check_branch
          %183 = sbr.rel (%p181) target = $region36
        $region35: #{tpu_custom_call.1} parent=31 // pred_region
          %p184 = scmp.lt.s32.totalorder %s14, 1
          %s185 = scalar_select %p184, %s14, 1
          %s186 = smul.addr %s185, 3
          %s187 = smul.addr %s186, 4
          %s188 = scalar_lea.vmem %s0, %s187
        $region36: #{tpu_custom_call.1} parent=31 // pred_fallthru
          _
      $region32: #{tpu_custom_call.1} parent=5 // pred_fallthru
        _
      %p189 = scmp.le.s32.totalorder 1, %s14
      %p190 = scmp.lt.s32.totalorder %s14, 3
      %p191 = pnand %p189, %p190
      %p192 = pneg %p191
      // Predicated region
      $region37: #{tpu_custom_call.1} parent=5 // pred_check
        _
      $region38: #{tpu_custom_call.1} parent=5 // pred_check_branch
        %194 = sbr.rel (%p191) target = $region40
      $region39: #{tpu_custom_call.1} parent=5 // pred_region
        %s195 = ssub.s32 %s14, 1
        %p196 = scmp.lt.s32.totalorder %s19, 1
        %s197 = scalar_select %p196, %s19, 1
        %s198 = smul.addr %s197, 3
        %s199 = smul.addr %s198, 4
        %s200 = scalar_lea.vmem %s0, %s199
        %p201 = pneg %p40
        %p202 = pneg %p37
        %p203 = pneg %p61
        %p204 = pneg %p58
        %p205 = pneg %p82
        %p206 = pneg %p79
        %p207 = pneg %p103
        %p208 = pneg %p100
        %p209 = pneg %p124
        %p210 = pneg %p121
        %p211 = pneg %p150
        %p212 = pneg %p147
        %s213 = sand.u32 %s137, 1
        %s214 = scalar_lea.sflag [#allocation3], %s213
        %s215 = sand.u32 %s137, 1
        %s216 = smul.addr %s215, 8
        %s217 = scalar_lea.vmem [#allocation2], %s216
        %p218 = scmp.lt.s32.totalorder %s19, 1
        %s219 = scalar_select %p218, %s19, 1
        %s220 = smul.addr %s219, 3
        %s221 = smul.addr %s220, 4
        %s222 = scalar_lea.vmem %s0, %s221
        %v224 = vld [vmem:[%s222] sm:$0xf]
        %v225 = vld [vmem:[%s222 + $0x4] sm:$0xf]
        %v226 = vld [vmem:[%s222 + $0x8] sm:$0x3]
        %v227 = vld [vmem:[%s1] sm:$0xf]
        %v228 = vld [vmem:[%s1 + $0x4] sm:$0xf]
        %s229 = scalar_lea.vmem %s1, 8
        %v230 = vld [vmem:[%s229] sm:$0xf]
        %v231 = vld [vmem:[%s229 + $0x4] sm:$0xf]
        %v235 = vunpack.c.l.b16 %v224
        %v236 = vunpack.c.l.b16 %v225
        %v237 = vunpack.c.l.b16 %v226
        %v238 = vpack.c.b16 %v236, %v235
        %v239 = vpack.c.b16 %v237, %v237
        %vm240 = vsmask.f32 7424
        %v242 = vshrl.u32 %v238, 16
        %v244 = vshll.u32 %v238, 16
        %v246 = vrot.slane %v244, 1
        %v247 = vor.u32 %v242, %v246
        %v249 = vshll.u32 %v239, 16
        %v251 = vrot.slane %v249, 1
        %v252 = vsel %vm240, %v247, %v251
        %v255 = vunpack.c.l.b16 %v230
        %v256 = vunpack.c.l.b16 %v231
        %v257 = vpack.c.b16 %v256, %v255
        %vm259 = vcmask 130048
        %v261 = vsel %vm259, %v252, 0
        %263 = vmatprep.subr.bf16.mxu0 0
        %264 = vmatpush1.bf16.msra.mxu0 0
        %265 = vmatprep.subr.bf16.mxu0 0
        %266 = vmatpush1.bf16.msra.mxu0 0
        %267 = vmatprep.subr.bf16.mxu0 0
        %268 = vmatpush1.bf16.msra.mxu0 0
        %269 = vmatprep.subr.bf16.mxu0 0
        %270 = vmatpush1.bf16.msra.mxu0 0
        %271 = vmatprep.subr.bf16.mxu0 0
        %272 = vmatpush1.bf16.msra.mxu0 0
        %273 = vmatprep.subr.bf16.mxu0 0
        %274 = vmatpush1.bf16.msra.mxu0 0
        %275 = vmatprep.subr.bf16.mxu0 0
        %276 = vmatpush1.bf16.msra.mxu0 0
        %277 = vmatprep.subr.bf16.mxu0 0
        %278 = vmatpush1.bf16.msra.mxu0 %v257
        %279 = vmatprep.subr.bf16.mxu0 0
        %280 = vmatpush2.bf16.msra.mxu0 0
        %281 = vmatprep.subr.bf16.mxu0 0
        %282 = vmatpush2.bf16.msra.mxu0 0
        %283 = vmatprep.subr.bf16.mxu0 0
        %284 = vmatpush2.bf16.msra.mxu0 0
        %285 = vmatprep.subr.bf16.mxu0 0
        %286 = vmatpush2.bf16.msra.mxu0 0
        %287 = vmatprep.subr.bf16.mxu0 0
        %288 = vmatpush2.bf16.msra.mxu0 0
        %289 = vmatprep.subr.bf16.mxu0 0
        %290 = vmatpush2.bf16.msra.mxu0 0
        %291 = vmatprep.subr.bf16.mxu0 0
        %292 = vmatpush2.bf16.msra.mxu0 0
        %293 = vmatprep.subr.bf16.mxu0 0
        %294 = vmatpush2.bf16.msra.mxu0 0
        %295 = vmatprep.mubr.bf16.mxu0 0
        %296 = vmatmul.mubr.bf16.gmra.mxu0 %v261
        %v297 = vpop.f32.mrf.mxu0
        %v298 = vadd.f32 0.0, %v297
        %v299 = vpop.f32.mrf.mxu0
        %v300 = vpop.f32.mrf.mxu0
        %v301 = vadd.f32 0.0, %v300
        %v302 = vpop.f32.mrf.mxu0
        %303 = vdwg.mxu0
        %v306 = vunpack.c.l.b16 %v227
        %v307 = vunpack.c.l.b16 %v228
        %v308 = vpack.c.b16 %v307, %v306
        %v310 = vsel %vm259, %v238, 0
        %312 = vmatprep.subr.bf16.mxu0 0
        %313 = vmatpush1.bf16.msra.mxu0 0
        %314 = vmatprep.subr.bf16.mxu0 0
        %315 = vmatpush1.bf16.msra.mxu0 0
        %316 = vmatprep.subr.bf16.mxu0 0
        %317 = vmatpush1.bf16.msra.mxu0 0
        %318 = vmatprep.subr.bf16.mxu0 0
        %319 = vmatpush1.bf16.msra.mxu0 0
        %320 = vmatprep.subr.bf16.mxu0 0
        %321 = vmatpush1.bf16.msra.mxu0 0
        %322 = vmatprep.subr.bf16.mxu0 0
        %323 = vmatpush1.bf16.msra.mxu0 0
        %324 = vmatprep.subr.bf16.mxu0 0
        %325 = vmatpush1.bf16.msra.mxu0 0
        %326 = vmatprep.subr.bf16.mxu0 0
        %327 = vmatpush1.bf16.msra.mxu0 %v308
        %328 = vmatprep.subr.bf16.mxu0 0
        %329 = vmatpush2.bf16.msra.mxu0 0
        %330 = vmatprep.subr.bf16.mxu0 0
        %331 = vmatpush2.bf16.msra.mxu0 0
        %332 = vmatprep.subr.bf16.mxu0 0
        %333 = vmatpush2.bf16.msra.mxu0 0
        %334 = vmatprep.subr.bf16.mxu0 0
        %335 = vmatpush2.bf16.msra.mxu0 0
        %336 = vmatprep.subr.bf16.mxu0 0
        %337 = vmatpush2.bf16.msra.mxu0 0
        %338 = vmatprep.subr.bf16.mxu0 0
        %339 = vmatpush2.bf16.msra.mxu0 0
        %340 = vmatprep.subr.bf16.mxu0 0
        %341 = vmatpush2.bf16.msra.mxu0 0
        %342 = vmatprep.subr.bf16.mxu0 0
        %343 = vmatpush2.bf16.msra.mxu0 0
        %344 = vmatprep.mubr.bf16.mxu0 0
        %345 = vmatmul.mubr.bf16.gmra.mxu0 %v310
        %v346 = vpop.f32.mrf.mxu0
        %v347 = vadd.f32 %v298, %v346
        %v348 = vpop.f32.mrf.mxu0
        %v349 = vpop.f32.mrf.mxu0
        %v350 = vadd.f32 %v301, %v349
        %v351 = vpop.f32.mrf.mxu0
        %352 = vdwg.mxu0
        %s353 = scalar_lea.vmem %s1, 16
        %v354 = vld [vmem:[%s353] sm:$0xf]
        %v355 = vld [vmem:[%s353 + $0x4] sm:$0xf]
        %vm356 = vcmask 1046528
        %v357 = vrot.slane %v238, 1
        %v358 = vrot.slane %v239, 1
        %v359 = vsel %vm356, %v357, %v358
        %v362 = vunpack.c.l.b16 %v354
        %v363 = vunpack.c.l.b16 %v355
        %v364 = vpack.c.b16 %v363, %v362
        %v367 = vsel %vm259, %v359, 0
        %369 = vmatprep.subr.bf16.mxu0 0
        %370 = vmatpush1.bf16.msra.mxu0 0
        %371 = vmatprep.subr.bf16.mxu0 0
        %372 = vmatpush1.bf16.msra.mxu0 0
        %373 = vmatprep.subr.bf16.mxu0 0
        %374 = vmatpush1.bf16.msra.mxu0 0
        %375 = vmatprep.subr.bf16.mxu0 0
        %376 = vmatpush1.bf16.msra.mxu0 0
        %377 = vmatprep.subr.bf16.mxu0 0
        %378 = vmatpush1.bf16.msra.mxu0 0
        %379 = vmatprep.subr.bf16.mxu0 0
        %380 = vmatpush1.bf16.msra.mxu0 0
        %381 = vmatprep.subr.bf16.mxu0 0
        %382 = vmatpush1.bf16.msra.mxu0 0
        %383 = vmatprep.subr.bf16.mxu0 0
        %384 = vmatpush1.bf16.msra.mxu0 %v364
        %385 = vmatprep.subr.bf16.mxu0 0
        %386 = vmatpush2.bf16.msra.mxu0 0
        %387 = vmatprep.subr.bf16.mxu0 0
        %388 = vmatpush2.bf16.msra.mxu0 0
        %389 = vmatprep.subr.bf16.mxu0 0
        %390 = vmatpush2.bf16.msra.mxu0 0
        %391 = vmatprep.subr.bf16.mxu0 0
        %392 = vmatpush2.bf16.msra.mxu0 0
        %393 = vmatprep.subr.bf16.mxu0 0
        %394 = vmatpush2.bf16.msra.mxu0 0
        %395 = vmatprep.subr.bf16.mxu0 0
        %396 = vmatpush2.bf16.msra.mxu0 0
        %397 = vmatprep.subr.bf16.mxu0 0
        %398 = vmatpush2.bf16.msra.mxu0 0
        %399 = vmatprep.subr.bf16.mxu0 0
        %400 = vmatpush2.bf16.msra.mxu0 0
        %401 = vmatprep.mubr.bf16.mxu0 0
        %402 = vmatmul.mubr.bf16.gmra.mxu0 %v367
        %v403 = vpop.f32.mrf.mxu0
        %v404 = vadd.f32 0.0, %v403
        %v405 = vpop.f32.mrf.mxu0
        %v406 = vpop.f32.mrf.mxu0
        %v407 = vadd.f32 0.0, %v406
        %v408 = vpop.f32.mrf.mxu0
        %409 = vdwg.mxu0
        %v410 = vadd.f32 %v347, %v404
        %v411 = vadd.f32 %v350, %v407
        %s412 = scalar_lea.vmem %s1, 24
        %v413 = vld [vmem:[%s412] sm:$0xf]
        %v414 = vld [vmem:[%s412 + $0x4] sm:$0xf]
        %vm415 = vsmask.f32 6400
        %v416 = vrot.slane %v242, 1
        %v417 = vrot.slane %v244, 2
        %v418 = vor.u32 %v416, %v417
        %v419 = vshrl.u32 %v239, 16
        %v421 = vrot.slane %v419, 1
        %v422 = vrot.slane %v249, 2
        %v423 = vor.u32 %v421, %v422
        %v424 = vsel %vm415, %v418, %v423
        %v427 = vunpack.c.l.b16 %v413
        %v428 = vunpack.c.l.b16 %v414
        %v429 = vpack.c.b16 %v428, %v427
        %v432 = vsel %vm259, %v424, 0
        %434 = vmatprep.subr.bf16.mxu0 0
        %435 = vmatpush1.bf16.msra.mxu0 0
        %436 = vmatprep.subr.bf16.mxu0 0
        %437 = vmatpush1.bf16.msra.mxu0 0
        %438 = vmatprep.subr.bf16.mxu0 0
        %439 = vmatpush1.bf16.msra.mxu0 0
        %440 = vmatprep.subr.bf16.mxu0 0
        %441 = vmatpush1.bf16.msra.mxu0 0
        %442 = vmatprep.subr.bf16.mxu0 0
        %443 = vmatpush1.bf16.msra.mxu0 0
        %444 = vmatprep.subr.bf16.mxu0 0
        %445 = vmatpush1.bf16.msra.mxu0 0
        %446 = vmatprep.subr.bf16.mxu0 0
        %447 = vmatpush1.bf16.msra.mxu0 0
        %448 = vmatprep.subr.bf16.mxu0 0
        %449 = vmatpush1.bf16.msra.mxu0 %v429
        %450 = vmatprep.subr.bf16.mxu0 0
        %451 = vmatpush2.bf16.msra.mxu0 0
        %452 = vmatprep.subr.bf16.mxu0 0
        %453 = vmatpush2.bf16.msra.mxu0 0
        %454 = vmatprep.subr.bf16.mxu0 0
        %455 = vmatpush2.bf16.msra.mxu0 0
        %456 = vmatprep.subr.bf16.mxu0 0
        %457 = vmatpush2.bf16.msra.mxu0 0
        %458 = vmatprep.subr.bf16.mxu0 0
        %459 = vmatpush2.bf16.msra.mxu0 0
        %460 = vmatprep.subr.bf16.mxu0 0
        %461 = vmatpush2.bf16.msra.mxu0 0
        %462 = vmatprep.subr.bf16.mxu0 0
        %463 = vmatpush2.bf16.msra.mxu0 0
        %464 = vmatprep.subr.bf16.mxu0 0
        %465 = vmatpush2.bf16.msra.mxu0 0
        %466 = vmatprep.mubr.bf16.mxu0 0
        %467 = vmatmul.mubr.bf16.gmra.mxu0 %v432
        %v468 = vpop.f32.mrf.mxu0
        %v469 = vadd.f32 0.0, %v468
        %v470 = vpop.f32.mrf.mxu0
        %v471 = vpop.f32.mrf.mxu0
        %v472 = vadd.f32 0.0, %v471
        %v473 = vpop.f32.mrf.mxu0
        %474 = vdwg.mxu0
        %v475 = vadd.f32 %v410, %v469
        %v476 = vadd.f32 %v411, %v472
        %s477 = scalar_lea.vmem %s1, 32
        %v478 = vld [vmem:[%s477] sm:$0xf]
        %v479 = vld [vmem:[%s477 + $0x4] sm:$0xf]
        %vm480 = vcmask 1045504
        %v481 = vrot.slane %v238, 2
        %v482 = vrot.slane %v239, 2
        %v483 = vsel %vm480, %v481, %v482
        %v486 = vunpack.c.l.b16 %v478
        %v487 = vunpack.c.l.b16 %v479
        %v488 = vpack.c.b16 %v487, %v486
        %v491 = vsel %vm259, %v483, 0
        %493 = vmatprep.subr.bf16.mxu0 0
        %494 = vmatpush1.bf16.msra.mxu0 0
        %495 = vmatprep.subr.bf16.mxu0 0
        %496 = vmatpush1.bf16.msra.mxu0 0
        %497 = vmatprep.subr.bf16.mxu0 0
        %498 = vmatpush1.bf16.msra.mxu0 0
        %499 = vmatprep.subr.bf16.mxu0 0
        %500 = vmatpush1.bf16.msra.mxu0 0
        %501 = vmatprep.subr.bf16.mxu0 0
        %502 = vmatpush1.bf16.msra.mxu0 0
        %503 = vmatprep.subr.bf16.mxu0 0
        %504 = vmatpush1.bf16.msra.mxu0 0
        %505 = vmatprep.subr.bf16.mxu0 0
        %506 = vmatpush1.bf16.msra.mxu0 0
        %507 = vmatprep.subr.bf16.mxu0 0
        %508 = vmatpush1.bf16.msra.mxu0 %v488
        %509 = vmatprep.subr.bf16.mxu0 0
        %510 = vmatpush2.bf16.msra.mxu0 0
        %511 = vmatprep.subr.bf16.mxu0 0
        %512 = vmatpush2.bf16.msra.mxu0 0
        %513 = vmatprep.subr.bf16.mxu0 0
        %514 = vmatpush2.bf16.msra.mxu0 0
        %515 = vmatprep.subr.bf16.mxu0 0
        %516 = vmatpush2.bf16.msra.mxu0 0
        %517 = vmatprep.subr.bf16.mxu0 0
        %518 = vmatpush2.bf16.msra.mxu0 0
        %519 = vmatprep.subr.bf16.mxu0 0
        %520 = vmatpush2.bf16.msra.mxu0 0
        %521 = vmatprep.subr.bf16.mxu0 0
        %522 = vmatpush2.bf16.msra.mxu0 0
        %523 = vmatprep.subr.bf16.mxu0 0
        %524 = vmatpush2.bf16.msra.mxu0 0
        %525 = vmatprep.mubr.bf16.mxu0 0
        %526 = vmatmul.mubr.bf16.gmra.mxu0 %v491
        %v527 = vpop.f32.mrf.mxu0
        %v528 = vadd.f32 0.0, %v527
        %v529 = vpop.f32.mrf.mxu0
        %v530 = vpop.f32.mrf.mxu0
        %v531 = vadd.f32 0.0, %v530
        %v532 = vpop.f32.mrf.mxu0
        %533 = vdwg.mxu0
        %v534 = vadd.f32 %v475, %v528
        %v535 = vadd.f32 %v476, %v531
        %v536 = vld [vmem:[%s2] sm:$0x1]
        %v538 = vlaneseq
        %v539 = vshrl.u32 %v538, 7
        %v540 = vsub.s32 0, %v539
        %v541 = vrot.slane %v536, %v540
        %v543 = vadd.f32 %v534, %v541
        %v544 = vadd.f32 %v535, %v541
        %v545 = vmax.f32 %v543, 0.0
        %v546 = vmax.f32 %v544, 0.0
        %v547 = vld [vmem:[%s3] sm:$0x1]
        %v549 = vlaneseq
        %v550 = vshrl.u32 %v549, 7
        %v551 = vsub.s32 0, %v550
        %v552 = vrot.slane %v547, %v551
        %v554 = vmul.f32 %v545, %v552
        %v555 = vmul.f32 %v546, %v552
        %v556 = vld [vmem:[%s4] sm:$0x1]
        %v558 = vlaneseq
        %v559 = vshrl.u32 %v558, 7
        %v560 = vsub.s32 0, %v559
        %v561 = vrot.slane %v556, %v560
        %v563 = vadd.f32 %v554, %v561
        %v564 = vadd.f32 %v555, %v561
        %v565 = vpack.c.bf16 %v564, %v563
        %v567 = vunpack.c.l.b16 %v565
        %v568 = vunpack.c.h.b16 %v565
        %v569 = vpack.c.b16 %v567, %v567
        %v570 = vpack.c.b16 %v568, %v568
        %573 = vst [vmem:[%s217] sm:$0xf] %v569
        %574 = vst [vmem:[%s217 + $0x4] sm:$0xf] %v570
        %s575 = sand.u32 %s137, 1
        %s576 = scalar_lea.sflag [#allocation3], %s575
        %s577 = sand.u32 %s137, 1
        %s578 = smul.addr %s577, 8
        %s579 = scalar_lea.vmem [#allocation2], %s578
        // Predicated region
        $region41: #{tpu_custom_call.1} parent=39 // pred_check
          %p580 = pneg %p147
        $region42: #{tpu_custom_call.1} parent=39 // pred_check_branch
          %582 = sbr.rel (%p580) target = $region44
        $region43: #{tpu_custom_call.1} parent=39 // pred_region
          %s584 = ssub.s32 128, 128
          %585 = vsyncadd %s576, %s584
          %s586 = smul.addr %s19, 2
          %s587 = smul.addr %s586, 64
          %s588 = scalar_lea.hbm %s5, %s587
          %s589 = sshll.u32 %s579, 4
          %s590 = int_to_ptr.vmem [resolvable:$true] %s589
          %595 = dma.vmem_to_hbm [thread:$0]  %s590, 128, %s588, %s576, 64, 64, 4
        $region44: #{tpu_custom_call.1} parent=39 // pred_fallthru
          _
      $region40: #{tpu_custom_call.1} parent=5 // pred_fallthru
        _
      %p596 = scmp.le.s32.totalorder 2, %s14
      // Predicated region
      $region45: #{tpu_custom_call.1} parent=5 // pred_check
        %p597 = pneg %p596
      $region46: #{tpu_custom_call.1} parent=5 // pred_check_branch
        %599 = sbr.rel (%p597) target = $region48
      $region47: #{tpu_custom_call.1} parent=5 // pred_region
        %s600 = ssub.s32 %s14, 2
        // Predicated region
        $region49: #{tpu_custom_call.1} parent=47 // pred_check
          %p601 = pneg %p153
        $region50: #{tpu_custom_call.1} parent=47 // pred_check_branch
          %603 = sbr.rel (%p601) target = $region52
        $region51: #{tpu_custom_call.1} parent=47 // pred_region
          %s604 = sand.u32 %s138, 1
          %s605 = scalar_lea.sflag [#allocation3], %s604
          %s606 = sand.u32 %s138, 1
          %s607 = smul.addr %s606, 8
          %s608 = scalar_lea.vmem [#allocation2], %s607
          %609 = dma.done %s605, 128
        $region52: #{tpu_custom_call.1} parent=47 // pred_fallthru
          _
      $region48: #{tpu_custom_call.1} parent=5 // pred_fallthru
        _
    $region6: #{tpu_custom_call.1} parent=1 // loop_footer
      %s18 = sadd.s32 1, %s14
    $region7: #{tpu_custom_call.1} parent=1 // loop_footer_branch
      %13 = sbr.rel target = $region3
    $region8: #{tpu_custom_call.1} parent=1 // loop_exit
      _
    %610 = vsyncpa [#allocation3], 1
    %s611 = scalar_lea.sflag [#allocation3], 1
    %612 = vsyncpa %s611, 1

</llo_original>
